<compile_context>
chip_gen: v7x
topology: tpu7x:2x2x1
jax: 0.10.0
libtpu: 0.0.40
codegen_flags: <defaults>
</compile_context>

<pallas_src>
import functools

import jax
import jax.numpy as jnp
from jax.experimental import pallas as pl
from jax.experimental.pallas import tpu as pltpu

LANE = 128


# ----------------------------- Pallas kernel --------------------------------

def fused_gcn_kernel(a_ref, x_ref, wpack_ref, bpack_ref, o_ref):
    """out = log_softmax( relu(A(relu(A(XW1)+b1)W2)+b2) @ Wfc + bfc ).

    a_ref:     bf16 [Np, Np]   padded normalized adjacency
    x_ref:     bf16 [Np, 128]  padded node features
    wpack_ref: bf16 [3,128,128] packed (W1, W2, Wfc), each zero-padded
    bpack_ref: f32  [3,1,128]   packed (b1, b2, b_fc); padded b_fc lanes = -1e9
    o_ref:     f32  [Np, 128]   lane-dense log-softmax output
    """
    a_bf = a_ref[...]                                   # bf16 [Np, Np]
    w1 = wpack_ref[0]                                   # bf16 [128, 128]
    w2 = wpack_ref[1]
    wfc = wpack_ref[2]
    b1 = bpack_ref[0]                                   # f32 [1, 128]
    b2 = bpack_ref[1]
    bfc = bpack_ref[2]

    # ---- GCN layer 1: h1 = relu(A @ (X @ W1) + b1) ----
    xw1 = jnp.dot(x_ref[...], w1, preferred_element_type=jnp.float32)
    h1 = jnp.dot(a_bf, xw1.astype(jnp.bfloat16),
                 preferred_element_type=jnp.float32)
    h1 = jnp.maximum(h1 + b1, 0.0)
    # TODO(synk): F.dropout skipped — identity in eval mode (training=False).

    # ---- GCN layer 2: h2 = relu(A @ (h1 @ W2) + b2) ----
    xw2 = jnp.dot(h1.astype(jnp.bfloat16), w2,
                  preferred_element_type=jnp.float32)
    h2 = jnp.dot(a_bf, xw2.astype(jnp.bfloat16),
                 preferred_element_type=jnp.float32)
    h2 = jnp.maximum(h2 + b2, 0.0)

    # ---- FC head + stable log-softmax (padded class lanes carry -1e9) ----
    logits = jnp.dot(h2.astype(jnp.bfloat16), wfc,
                     preferred_element_type=jnp.float32) + bfc
    m = jnp.max(logits, axis=-1, keepdims=True)
    s = logits - m
    lse = jnp.log(jnp.sum(jnp.exp(s), axis=-1, keepdims=True))
    o_ref[...] = s - lse


# ------------------------------ Wrappers -------------------------------------

_VMEM = pl.BlockSpec(memory_space=pltpu.MemorySpace.VMEM)


def _round_up(x, m):
    return (x + m - 1) // m * m


def _pad2(a, shape):
    return jnp.pad(a, [(0, t - s) for s, t in zip(a.shape, shape)])


def build_norm_adj(edge_index, num_nodes):
    """Dense D^-1/2 (A + I) D^-1/2 from a [2, E] edge index (JAX glue).

    Matches PyG add_remaining_self_loops / gcn_norm on a binary, symmetrized
    adjacency: the diagonal is SET to 1 (never 2). Precompute once per graph.
    """
    src, dst = edge_index[0], edge_index[1]
    a = jnp.zeros((num_nodes, num_nodes), jnp.float32)
    a = a.at[src, dst].set(1.0)
    a = a.at[dst, src].set(1.0)          # Cora-style undirected edge list
    diag = jnp.arange(num_nodes)
    a = a.at[diag, diag].set(1.0)
    deg = jnp.sum(a, axis=1)
    d_inv_sqrt = 1.0 / jnp.sqrt(deg)
    return a * d_inv_sqrt[:, None] * d_inv_sqrt[None, :]


def preprocess(params, x, edge_index, num_nodes):
    """One-time graph + parameter prep (hoisted out of the jitted forward).

    Builds A_hat, zero-pads every lane dim to 128, casts MXU operands to bf16,
    and packs the three weights / three biases into single VMEM buffers.
    """
    f_in = x.shape[1]
    h1 = params["w1"].shape[1]
    h2 = params["w2"].shape[1]
    c = params["w_fc"].shape[1]

    n_p = _round_up(num_nodes, LANE)
    f_p = _round_up(f_in, LANE)
    h1_p = _round_up(h1, LANE)
    h2_p = _round_up(h2, LANE)
    c_p = _round_up(c, LANE)
    # Packed-weight layout assumes every weight tile pads to the same [128,128]
    # shape (true for the Cora-style toy config: all dims <= 128).
    assert f_p == h1_p == h2_p == c_p == LANE, "packing assumes dims <= 128"

    a_hat = build_norm_adj(edge_index, num_nodes)            # f32 [N, N]
    a_p = _pad2(a_hat, (n_p, n_p)).astype(jnp.bfloat16)      # zero rows/cols
    x_p = _pad2(x, (n_p, f_p)).astype(jnp.bfloat16)

    w1 = _pad2(params["w1"], (f_p, h1_p))
    w2 = _pad2(params["w2"], (h1_p, h2_p))
    wfc = _pad2(params["w_fc"], (h2_p, c_p))
    wpack = jnp.stack([w1, w2, wfc]).astype(jnp.bfloat16)    # bf16 [3,128,128]

    b1 = jnp.zeros((h1_p,), jnp.float32).at[:h1].set(params["b1"])
    b2 = jnp.zeros((h2_p,), jnp.float32).at[:h2].set(params["b2"])
    # Padded class lanes get -1e9 so log_softmax ignores them.
    bfc = jnp.full((c_p,), -1e9, jnp.float32).at[:c].set(params["b_fc"])
    bpack = jnp.stack([b1, b2, bfc]).reshape(3, 1, LANE)     # f32 [3,1,128]

    return a_p, x_p, wpack, bpack


@functools.partial(jax.jit, static_argnames=("num_nodes", "num_classes"))
def gcn_net_cora_forward(a_p, x_p, wpack, bpack, *, num_nodes, num_classes):
    """Fused inference-mode forward on pre-padded, pre-cast bf16 operands."""
    n_p = a_p.shape[0]
    f_p = x_p.shape[1]
    d_p = wpack.shape[-1]                       # 128 (H1 = H2_pad = C_pad)

    flops = 2 * (n_p * f_p * d_p      # X @ W1
                 + n_p * n_p * d_p    # A @ XW1
                 + n_p * d_p * d_p    # h1 @ W2
                 + n_p * n_p * d_p    # A @ XW2
                 + n_p * d_p * d_p)   # h2 @ Wfc
    bytes_accessed = (a_p.size * 2 + x_p.size * 2 + wpack.size * 2
                      + bpack.size * 4 + n_p * d_p * 4)

    out = pl.pallas_call(
        fused_gcn_kernel,
        out_shape=jax.ShapeDtypeStruct((n_p, d_p), jnp.float32),
        in_specs=[_VMEM, _VMEM, _VMEM, _VMEM],
        out_specs=_VMEM,
        cost_estimate=pl.CostEstimate(
            flops=flops,
            transcendentals=n_p * d_p + n_p,    # exp + log in log-softmax
            bytes_accessed=bytes_accessed),
        # TODO(synk): add a parallel node-row grid with streamed A_hat tiles
        # for real-Cora scale (required on v7x's 64 MiB VMEM / 2 TCs).
    )(a_p, x_p, wpack, bpack)
    return out[:num_nodes, :num_classes]


def reference_forward(params, x, a_hat):
    """Pure-JAX f32 reference (module semantics, eval mode)."""
    h1 = jnp.maximum(a_hat @ (x @ params["w1"]) + params["b1"], 0.0)
    h2 = jnp.maximum(a_hat @ (h1 @ params["w2"]) + params["b2"], 0.0)
    logits = h2 @ params["w_fc"] + params["b_fc"]
    return jax.nn.log_softmax(logits, axis=1)


# ------------------------------- Main ----------------------------------------

if __name__ == "__main__":
    # Small, Cora-like synthetic sizes.
    NUM_NODES = 64
    NUM_FEATURES = 32
    HIDDEN1 = 128
    HIDDEN2 = 16
    NUM_CLASSES = 8
    NUM_EDGES = 256

    key = jax.random.PRNGKey(0)
    k_x, k_e, k_w1, k_w2, k_wfc, k_b = jax.random.split(key, 6)

    x = jax.random.normal(k_x, (NUM_NODES, NUM_FEATURES), jnp.float32)
    edge_index = jax.random.randint(k_e, (2, NUM_EDGES), 0, NUM_NODES,
                                    dtype=jnp.int32)

    params = {
        "w1": jax.random.normal(k_w1, (NUM_FEATURES, HIDDEN1), jnp.float32)
              * (1.0 / jnp.sqrt(NUM_FEATURES)),
        "b1": jnp.zeros((HIDDEN1,), jnp.float32),
        "w2": jax.random.normal(k_w2, (HIDDEN1, HIDDEN2), jnp.float32)
              * (1.0 / jnp.sqrt(HIDDEN1)),
        "b2": jnp.zeros((HIDDEN2,), jnp.float32),
        # stored as (in, out) == W_fc^T relative to torch.nn.Linear
        "w_fc": jax.random.normal(k_wfc, (HIDDEN2, NUM_CLASSES), jnp.float32)
                * (1.0 / jnp.sqrt(HIDDEN2)),
        "b_fc": jax.random.normal(k_b, (NUM_CLASSES,), jnp.float32) * 0.01,
    }

    # One-time preprocessing: A_hat build + padding + bf16 casts + packing,
    # all hoisted out of the per-forward path.
    a_p, x_p, wpack, bpack = preprocess(params, x, edge_index, NUM_NODES)
    a_p, x_p, wpack, bpack = jax.block_until_ready((a_p, x_p, wpack, bpack))

    out = gcn_net_cora_forward(a_p, x_p, wpack, bpack,
                               num_nodes=NUM_NODES, num_classes=NUM_CLASSES)
    out = jax.block_until_ready(out)

    assert out.shape == (NUM_NODES, NUM_CLASSES)
    # log_softmax rows must sum to 1 in probability space.
    row_sums = jnp.exp(out).sum(axis=1)
    assert bool(jnp.allclose(row_sums, 1.0, atol=1e-3))
    # Loose parity vs. f32 reference (bf16 MXU operands -> loose tolerance).
    ref = reference_forward(params, x, build_norm_adj(edge_index, NUM_NODES))
    assert bool(jnp.max(jnp.abs(out - ref)) < 0.25)

    print("KERNEL_OK")
</pallas_src>

<mosaic_0001>
module attributes {stable_mosaic.version = 11 : i64} {
  func.func @fused_gcn_kernel(%arg0: memref<128x128xbf16, #tpu.memory_space<vmem>>, %arg1: memref<128x128xbf16, #tpu.memory_space<vmem>>, %arg2: memref<3x128x128xbf16, #tpu.memory_space<vmem>>, %arg3: memref<3x1x128xf32, #tpu.memory_space<vmem>>, %arg4: memref<128x128xf32, #tpu.memory_space<vmem>>) attributes {dimension_semantics = [], scalar_prefetch = 0 : i64, scratch_operands = 0 : i64, tpu.core_type = #tpu.core_type<tc>} {
    %c0 = arith.constant 0 : index
    %c0_0 = arith.constant 0 : index
    %0 = vector.load %arg0[%c0, %c0_0] : memref<128x128xbf16, #tpu.memory_space<vmem>>, vector<128x128xbf16>
    %c0_1 = arith.constant 0 : index
    %c0_2 = arith.constant 0 : index
    %c0_3 = arith.constant 0 : index
    %1 = vector.load %arg2[%c0_1, %c0_2, %c0_3] : memref<3x128x128xbf16, #tpu.memory_space<vmem>>, vector<1x128x128xbf16>
    %2 = vector.shape_cast %1 : vector<1x128x128xbf16> to vector<128x128xbf16>
    %c1 = arith.constant 1 : index
    %c0_4 = arith.constant 0 : index
    %c0_5 = arith.constant 0 : index
    %3 = vector.load %arg2[%c1, %c0_4, %c0_5] : memref<3x128x128xbf16, #tpu.memory_space<vmem>>, vector<1x128x128xbf16>
    %4 = vector.shape_cast %3 : vector<1x128x128xbf16> to vector<128x128xbf16>
    %c2 = arith.constant 2 : index
    %c0_6 = arith.constant 0 : index
    %c0_7 = arith.constant 0 : index
    %5 = vector.load %arg2[%c2, %c0_6, %c0_7] : memref<3x128x128xbf16, #tpu.memory_space<vmem>>, vector<1x128x128xbf16>
    %6 = vector.shape_cast %5 : vector<1x128x128xbf16> to vector<128x128xbf16>
    %c0_8 = arith.constant 0 : index
    %c0_9 = arith.constant 0 : index
    %c0_10 = arith.constant 0 : index
    %7 = vector.load %arg3[%c0_8, %c0_9, %c0_10] : memref<3x1x128xf32, #tpu.memory_space<vmem>>, vector<1x1x128xf32>
    %8 = vector.shape_cast %7 : vector<1x1x128xf32> to vector<1x128xf32>
    %c1_11 = arith.constant 1 : index
    %c0_12 = arith.constant 0 : index
    %c0_13 = arith.constant 0 : index
    %9 = vector.load %arg3[%c1_11, %c0_12, %c0_13] : memref<3x1x128xf32, #tpu.memory_space<vmem>>, vector<1x1x128xf32>
    %10 = vector.shape_cast %9 : vector<1x1x128xf32> to vector<1x128xf32>
    %c2_14 = arith.constant 2 : index
    %c0_15 = arith.constant 0 : index
    %c0_16 = arith.constant 0 : index
    %11 = vector.load %arg3[%c2_14, %c0_15, %c0_16] : memref<3x1x128xf32, #tpu.memory_space<vmem>>, vector<1x1x128xf32>
    %12 = vector.shape_cast %11 : vector<1x1x128xf32> to vector<1x128xf32>
    %c0_17 = arith.constant 0 : index
    %c0_18 = arith.constant 0 : index
    %13 = vector.load %arg1[%c0_17, %c0_18] : memref<128x128xbf16, #tpu.memory_space<vmem>>, vector<128x128xbf16>
    %cst = arith.constant dense<0.000000e+00> : vector<128x128xf32>
    %14 = tpu.matmul %13, %2, %cst {dimension_numbers = #tpu.dot_dimension_numbers<[1], [0], [0], [1], [0, 0, 1, 1], [], []>} : vector<128x128xbf16>, vector<128x128xbf16>, vector<128x128xf32> -> vector<128x128xf32>
    %15 = arith.truncf %14 : vector<128x128xf32> to vector<128x128xbf16>
    %cst_19 = arith.constant dense<0.000000e+00> : vector<128x128xf32>
    %16 = tpu.matmul %0, %15, %cst_19 {dimension_numbers = #tpu.dot_dimension_numbers<[1], [0], [0], [1], [0, 0, 1, 1], [], []>} : vector<128x128xbf16>, vector<128x128xbf16>, vector<128x128xf32> -> vector<128x128xf32>
    %17 = vector.broadcast %8 : vector<1x128xf32> to vector<128x128xf32>
    %18 = arith.addf %16, %17 : vector<128x128xf32>
    %cst_20 = arith.constant 0.000000e+00 : f32
    %19 = vector.broadcast %cst_20 : f32 to vector<128x128xf32>
    %20 = arith.maximumf %18, %19 : vector<128x128xf32>
    %21 = arith.truncf %20 : vector<128x128xf32> to vector<128x128xbf16>
    %cst_21 = arith.constant dense<0.000000e+00> : vector<128x128xf32>
    %22 = tpu.matmul %21, %4, %cst_21 {dimension_numbers = #tpu.dot_dimension_numbers<[1], [0], [0], [1], [0, 0, 1, 1], [], []>} : vector<128x128xbf16>, vector<128x128xbf16>, vector<128x128xf32> -> vector<128x128xf32>
    %23 = arith.truncf %22 : vector<128x128xf32> to vector<128x128xbf16>
    %cst_22 = arith.constant dense<0.000000e+00> : vector<128x128xf32>
    %24 = tpu.matmul %0, %23, %cst_22 {dimension_numbers = #tpu.dot_dimension_numbers<[1], [0], [0], [1], [0, 0, 1, 1], [], []>} : vector<128x128xbf16>, vector<128x128xbf16>, vector<128x128xf32> -> vector<128x128xf32>
    %25 = vector.broadcast %10 : vector<1x128xf32> to vector<128x128xf32>
    %26 = arith.addf %24, %25 : vector<128x128xf32>
    %cst_23 = arith.constant 0.000000e+00 : f32
    %27 = vector.broadcast %cst_23 : f32 to vector<128x128xf32>
    %28 = arith.maximumf %26, %27 : vector<128x128xf32>
    %29 = arith.truncf %28 : vector<128x128xf32> to vector<128x128xbf16>
    %cst_24 = arith.constant dense<0.000000e+00> : vector<128x128xf32>
    %30 = tpu.matmul %29, %6, %cst_24 {dimension_numbers = #tpu.dot_dimension_numbers<[1], [0], [0], [1], [0, 0, 1, 1], [], []>} : vector<128x128xbf16>, vector<128x128xbf16>, vector<128x128xf32> -> vector<128x128xf32>
    %31 = vector.broadcast %12 : vector<1x128xf32> to vector<128x128xf32>
    %32 = arith.addf %30, %31 : vector<128x128xf32>
    %cst_25 = arith.constant dense<0xFF800000> : vector<128xf32>
    %33 = vector.multi_reduction <maximumf>, %32, %cst_25 [1] : vector<128x128xf32> to vector<128xf32>
    %34 = vector.shape_cast %33 : vector<128xf32> to vector<128x1xf32>
    %35 = vector.broadcast %34 : vector<128x1xf32> to vector<128x128xf32>
    %36 = arith.subf %32, %35 : vector<128x128xf32>
    %37 = math.exp %36 : vector<128x128xf32>
    %cst_26 = arith.constant dense<0.000000e+00> : vector<128xf32>
    %38 = vector.multi_reduction <add>, %37, %cst_26 [1] : vector<128x128xf32> to vector<128xf32>
    %39 = vector.shape_cast %38 : vector<128xf32> to vector<128x1xf32>
    %40 = math.log %39 : vector<128x1xf32>
    %41 = vector.broadcast %40 : vector<128x1xf32> to vector<128x128xf32>
    %42 = arith.subf %36, %41 : vector<128x128xf32>
    %c0_27 = arith.constant 0 : index
    %c0_28 = arith.constant 0 : index
    %43 = vector.load %arg4[%c0_27, %c0_28] : memref<128x128xf32, #tpu.memory_space<vmem>>, vector<128x128xf32>
    tpu.vector_store %arg4[%c0_27, %c0_28], %42 {strides = array<i32>} : memref<128x128xf32, #tpu.memory_space<vmem>>, vector<128x128xf32>,
    return
  }
}

</mosaic_0001>

<llo_original>
// kernel: gcn_net_cora_forward.1
$region0: #{gcn_net_cora_forward.1}
  #allocation0 [shape = 'u32[]', space=smem, size = 0x4, offset = 0x4, fixed_abs, tag = 'smem constant byte address 0x4 - core index']
  #allocation1 [shape = 'u32[144,128]{1,0:T(1,128)}', space=vmem, size = 0x12000, scoped, tag = 'internal scratch']
  %s0 = inlined_call_operand.hbm [shape: bf16[128,128], index: 0, kind: input, shape index: {}]
  %s1 = inlined_call_operand.hbm [shape: bf16[128,128], index: 1, kind: input, shape index: {}]
  %s2 = inlined_call_operand.hbm [shape: bf16[3,128,128], index: 2, kind: input, shape index: {}]
  %s3 = inlined_call_operand.vmem [shape: f32[3,1,128], index: 3, kind: input, shape index: {}]
  %s4 = inlined_call_operand.vmem [shape: f32[128,128], index: 4, kind: output, shape index: {}]
  %s5 = sld [smem:[#allocation0]]
  $region38: #{gcn_net_cora_forward.1} parent=0
    _
  %s7 = ssub.s32 1, %s5
  %s8 = scalar_select 0, %s7, %s5
  $region1: #{gcn_net_cora_forward.1} parent=0
    #allocation2 [shape = 'u8[32768]{0}', space=vmem, size = 0x8000, scoped, tag = 'input window, operand 0, single buffered']
    #allocation3 [shape = 's32[1]{0}', space=sflag, size = 0x4, scoped, tag = 'scoped memory for gcn_net_cora_forward.1']
    #allocation4 [shape = 'u8[32768]{0}', space=vmem, size = 0x8000, scoped, tag = 'input window, operand 1, single buffered']
    #allocation5 [shape = 's32[1]{0}', space=sflag, size = 0x4, scoped, tag = 'scoped memory for gcn_net_cora_forward.1']
    #allocation6 [shape = 'u8[98304]{0}', space=vmem, size = 0x18000, scoped, tag = 'input window, operand 2, single buffered']
    %9 = vsyncpa [#allocation3], 0
    %10 = vsyncpa [#allocation5], 0
    // Predicated region
    $region2: #{gcn_net_cora_forward.1} parent=1 // pred_check
      _
    $region3: #{gcn_net_cora_forward.1} parent=1 // pred_check_branch
      %12 = sbr.rel (0) target = $region5
    $region4: #{gcn_net_cora_forward.1} parent=1 // pred_region
      %s14 = ssub.s32 1024, 1024
      %15 = vsyncadd [#allocation3], %s14
      %s16 = sshll.u32 [#allocation2], 4
      %s17 = int_to_ptr.vmem [resolvable:$true] %s16
      %22 = dma.hbm_to_vmem [thread:$0]  %s0, 1024, %s17, [#allocation3], 64, 64, 4
    $region5: #{gcn_net_cora_forward.1} parent=1 // pred_fallthru
      _
    // Predicated region
    $region6: #{gcn_net_cora_forward.1} parent=1 // pred_check
      _
    $region7: #{gcn_net_cora_forward.1} parent=1 // pred_check_branch
      %24 = sbr.rel (0) target = $region9
    $region8: #{gcn_net_cora_forward.1} parent=1 // pred_region
      %s26 = ssub.s32 1024, 1024
      %27 = vsyncadd [#allocation5], %s26
      %s28 = sshll.u32 [#allocation4], 4
      %s29 = int_to_ptr.vmem [resolvable:$true] %s28
      %34 = dma.hbm_to_vmem [thread:$0]  %s1, 1024, %s29, [#allocation5], 64, 64, 4
    $region9: #{gcn_net_cora_forward.1} parent=1 // pred_fallthru
      _
    // Predicated region
    $region10: #{gcn_net_cora_forward.1} parent=1 // pred_check
      _
    $region11: #{gcn_net_cora_forward.1} parent=1 // pred_check_branch
      %36 = sbr.rel (0) target = $region13
    $region12: #{gcn_net_cora_forward.1} parent=1 // pred_region
      %s38 = ssub.s32 3072, 3072
      %39 = vsyncadd [#allocation5], %s38
      %s40 = sshll.u32 [#allocation6], 4
      %s41 = int_to_ptr.vmem [resolvable:$true] %s40
      %46 = dma.hbm_to_vmem [thread:$0]  %s2, 3072, %s41, [#allocation5], 64, 64, 4
    $region13: #{gcn_net_cora_forward.1} parent=1 // pred_fallthru
      _
    // Predicated region
    $region14: #{gcn_net_cora_forward.1} parent=1 // pred_check
      _
    $region15: #{gcn_net_cora_forward.1} parent=1 // pred_check_branch
      %48 = sbr.rel (0) target = $region17
    $region16: #{gcn_net_cora_forward.1} parent=1 // pred_region
      _
    $region17: #{gcn_net_cora_forward.1} parent=1 // pred_fallthru
      _
    // Predicated region
    $region18: #{gcn_net_cora_forward.1} parent=1 // pred_check
      _
    $region19: #{gcn_net_cora_forward.1} parent=1 // pred_check_branch
      %50 = sbr.rel (0) target = $region21
    $region20: #{gcn_net_cora_forward.1} parent=1 // pred_region
      %51 = dma.done [#allocation3], 1024
    $region21: #{gcn_net_cora_forward.1} parent=1 // pred_fallthru
      _
    // Predicated region
    $region22: #{gcn_net_cora_forward.1} parent=1 // pred_check
      _
    $region23: #{gcn_net_cora_forward.1} parent=1 // pred_check_branch
      %53 = sbr.rel (0) target = $region25
    $region24: #{gcn_net_cora_forward.1} parent=1 // pred_region
      %54 = dma.done [#allocation5], 1024
    $region25: #{gcn_net_cora_forward.1} parent=1 // pred_fallthru
      _
    // Predicated region
    $region26: #{gcn_net_cora_forward.1} parent=1 // pred_check
      _
    $region27: #{gcn_net_cora_forward.1} parent=1 // pred_check_branch
      %56 = sbr.rel (0) target = $region29
    $region28: #{gcn_net_cora_forward.1} parent=1 // pred_region
      %57 = dma.done [#allocation5], 3072
    $region29: #{gcn_net_cora_forward.1} parent=1 // pred_fallthru
      _
    %v59 = vld [vmem:[#allocation2] sm:$0xf]
    %v60 = vld [vmem:[#allocation2 + $0x4] sm:$0xf]
    %v61 = vld [vmem:[#allocation2 + $0x8] sm:$0xf]
    %v62 = vld [vmem:[#allocation2 + $0xc] sm:$0xf]
    %v63 = vld [vmem:[#allocation2 + $0x10] sm:$0xf]
    %v64 = vld [vmem:[#allocation2 + $0x14] sm:$0xf]
    %v65 = vld [vmem:[#allocation2 + $0x18] sm:$0xf]
    %v66 = vld [vmem:[#allocation2 + $0x1c] sm:$0xf]
    %v67 = vld [vmem:[#allocation2 + $0x20] sm:$0xf]
    %v68 = vld [vmem:[#allocation2 + $0x24] sm:$0xf]
    %v69 = vld [vmem:[#allocation2 + $0x28] sm:$0xf]
    %v70 = vld [vmem:[#allocation2 + $0x2c] sm:$0xf]
    %v71 = vld [vmem:[#allocation2 + $0x30] sm:$0xf]
    %v72 = vld [vmem:[#allocation2 + $0x34] sm:$0xf]
    %v73 = vld [vmem:[#allocation2 + $0x38] sm:$0xf]
    %v74 = vld [vmem:[#allocation2 + $0x3c] sm:$0xf]
    %v75 = vld [vmem:[#allocation6] sm:$0xf]
    %v76 = vld [vmem:[#allocation6 + $0x4] sm:$0xf]
    %v77 = vld [vmem:[#allocation6 + $0x8] sm:$0xf]
    %v78 = vld [vmem:[#allocation6 + $0xc] sm:$0xf]
    %v79 = vld [vmem:[#allocation6 + $0x10] sm:$0xf]
    %v80 = vld [vmem:[#allocation6 + $0x14] sm:$0xf]
    %v81 = vld [vmem:[#allocation6 + $0x18] sm:$0xf]
    %v82 = vld [vmem:[#allocation6 + $0x1c] sm:$0xf]
    %v83 = vld [vmem:[#allocation6 + $0x20] sm:$0xf]
    %v84 = vld [vmem:[#allocation6 + $0x24] sm:$0xf]
    %v85 = vld [vmem:[#allocation6 + $0x28] sm:$0xf]
    %v86 = vld [vmem:[#allocation6 + $0x2c] sm:$0xf]
    %v87 = vld [vmem:[#allocation6 + $0x30] sm:$0xf]
    %v88 = vld [vmem:[#allocation6 + $0x34] sm:$0xf]
    %v89 = vld [vmem:[#allocation6 + $0x38] sm:$0xf]
    %v90 = vld [vmem:[#allocation6 + $0x3c] sm:$0xf]
    %s91 = scalar_lea.vmem [#allocation6], 64
    %v92 = vld [vmem:[%s91] sm:$0xf]
    %v93 = vld [vmem:[%s91 + $0x4] sm:$0xf]
    %v94 = vld [vmem:[%s91 + $0x8] sm:$0xf]
    %v95 = vld [vmem:[%s91 + $0xc] sm:$0xf]
    %v96 = vld [vmem:[%s91 + $0x10] sm:$0xf]
    %v97 = vld [vmem:[%s91 + $0x14] sm:$0xf]
    %v98 = vld [vmem:[%s91 + $0x18] sm:$0xf]
    %v99 = vld [vmem:[%s91 + $0x1c] sm:$0xf]
    %v100 = vld [vmem:[%s91 + $0x20] sm:$0xf]
    %v101 = vld [vmem:[%s91 + $0x24] sm:$0xf]
    %v102 = vld [vmem:[%s91 + $0x28] sm:$0xf]
    %v103 = vld [vmem:[%s91 + $0x2c] sm:$0xf]
    %v104 = vld [vmem:[%s91 + $0x30] sm:$0xf]
    %v105 = vld [vmem:[%s91 + $0x34] sm:$0xf]
    %v106 = vld [vmem:[%s91 + $0x38] sm:$0xf]
    %v107 = vld [vmem:[%s91 + $0x3c] sm:$0xf]
    %s108 = scalar_lea.vmem [#allocation6], 128
    %v109 = vld [vmem:[%s108] sm:$0xf]
    %v110 = vld [vmem:[%s108 + $0x4] sm:$0xf]
    %v111 = vld [vmem:[%s108 + $0x8] sm:$0xf]
    %v112 = vld [vmem:[%s108 + $0xc] sm:$0xf]
    %v113 = vld [vmem:[%s108 + $0x10] sm:$0xf]
    %v114 = vld [vmem:[%s108 + $0x14] sm:$0xf]
    %v115 = vld [vmem:[%s108 + $0x18] sm:$0xf]
    %v116 = vld [vmem:[%s108 + $0x1c] sm:$0xf]
    %v117 = vld [vmem:[%s108 + $0x20] sm:$0xf]
    %v118 = vld [vmem:[%s108 + $0x24] sm:$0xf]
    %v119 = vld [vmem:[%s108 + $0x28] sm:$0xf]
    %v120 = vld [vmem:[%s108 + $0x2c] sm:$0xf]
    %v121 = vld [vmem:[%s108 + $0x30] sm:$0xf]
    %v122 = vld [vmem:[%s108 + $0x34] sm:$0xf]
    %v123 = vld [vmem:[%s108 + $0x38] sm:$0xf]
    %v124 = vld [vmem:[%s108 + $0x3c] sm:$0xf]
    %v125 = vld [vmem:[%s3] sm:$0x1]
    %s126 = scalar_lea.vmem %s3, 1
    %v127 = vld [vmem:[%s126] sm:$0x1]
    %s128 = scalar_lea.vmem %s3, 2
    %v129 = vld [vmem:[%s128] sm:$0x1]
    %v130 = vld [vmem:[#allocation4] sm:$0xf]
    %v131 = vld [vmem:[#allocation4 + $0x4] sm:$0xf]
    %v132 = vld [vmem:[#allocation4 + $0x8] sm:$0xf]
    %v133 = vld [vmem:[#allocation4 + $0xc] sm:$0xf]
    %v134 = vld [vmem:[#allocation4 + $0x10] sm:$0xf]
    %v135 = vld [vmem:[#allocation4 + $0x14] sm:$0xf]
    %v136 = vld [vmem:[#allocation4 + $0x18] sm:$0xf]
    %v137 = vld [vmem:[#allocation4 + $0x1c] sm:$0xf]
    %v138 = vld [vmem:[#allocation4 + $0x20] sm:$0xf]
    %v139 = vld [vmem:[#allocation4 + $0x24] sm:$0xf]
    %v140 = vld [vmem:[#allocation4 + $0x28] sm:$0xf]
    %v141 = vld [vmem:[#allocation4 + $0x2c] sm:$0xf]
    %v142 = vld [vmem:[#allocation4 + $0x30] sm:$0xf]
    %v143 = vld [vmem:[#allocation4 + $0x34] sm:$0xf]
    %v144 = vld [vmem:[#allocation4 + $0x38] sm:$0xf]
    %v145 = vld [vmem:[#allocation4 + $0x3c] sm:$0xf]
    %v162 = vunpack.c.l.b16 %v130
    %v163 = vunpack.c.l.b16 %v131
    %v164 = vunpack.c.l.b16 %v132
    %v165 = vunpack.c.l.b16 %v133
    %v166 = vunpack.c.l.b16 %v134
    %v167 = vunpack.c.l.b16 %v135
    %v168 = vunpack.c.l.b16 %v136
    %v169 = vunpack.c.l.b16 %v137
    %v170 = vunpack.c.l.b16 %v138
    %v171 = vunpack.c.l.b16 %v139
    %v172 = vunpack.c.l.b16 %v140
    %v173 = vunpack.c.l.b16 %v141
    %v174 = vunpack.c.l.b16 %v142
    %v175 = vunpack.c.l.b16 %v143
    %v176 = vunpack.c.l.b16 %v144
    %v177 = vunpack.c.l.b16 %v145
    %v178 = vpack.c.b16 %v163, %v162
    %v179 = vpack.c.b16 %v165, %v164
    %v180 = vpack.c.b16 %v167, %v166
    %v181 = vpack.c.b16 %v169, %v168
    %v182 = vpack.c.b16 %v171, %v170
    %v183 = vpack.c.b16 %v173, %v172
    %v184 = vpack.c.b16 %v175, %v174
    %v185 = vpack.c.b16 %v177, %v176
    %v210 = vunpack.c.l.b16 %v75
    %v211 = vunpack.c.l.b16 %v76
    %v212 = vunpack.c.l.b16 %v77
    %v213 = vunpack.c.l.b16 %v78
    %v214 = vunpack.c.l.b16 %v79
    %v215 = vunpack.c.l.b16 %v80
    %v216 = vunpack.c.l.b16 %v81
    %v217 = vunpack.c.l.b16 %v82
    %v218 = vunpack.c.l.b16 %v83
    %v219 = vunpack.c.l.b16 %v84
    %v220 = vunpack.c.l.b16 %v85
    %v221 = vunpack.c.l.b16 %v86
    %v222 = vunpack.c.l.b16 %v87
    %v223 = vunpack.c.l.b16 %v88
    %v224 = vunpack.c.l.b16 %v89
    %v225 = vunpack.c.l.b16 %v90
    %v226 = vpack.c.b16 %v211, %v210
    %v227 = vpack.c.b16 %v213, %v212
    %v228 = vpack.c.b16 %v215, %v214
    %v229 = vpack.c.b16 %v217, %v216
    %v230 = vpack.c.b16 %v219, %v218
    %v231 = vpack.c.b16 %v221, %v220
    %v232 = vpack.c.b16 %v223, %v222
    %v233 = vpack.c.b16 %v225, %v224
    %242 = vmatprep.subr.bf16.mxu0 0
    %243 = vmatpush1.bf16.msra.mxu0 %v226
    %244 = vmatprep.subr.bf16.mxu0 0
    %245 = vmatpush1.bf16.msra.mxu0 %v227
    %246 = vmatprep.subr.bf16.mxu0 0
    %247 = vmatpush1.bf16.msra.mxu0 %v228
    %248 = vmatprep.subr.bf16.mxu0 0
    %249 = vmatpush1.bf16.msra.mxu0 %v229
    %250 = vmatprep.subr.bf16.mxu0 0
    %251 = vmatpush1.bf16.msra.mxu0 %v230
    %252 = vmatprep.subr.bf16.mxu0 0
    %253 = vmatpush1.bf16.msra.mxu0 %v231
    %254 = vmatprep.subr.bf16.mxu0 0
    %255 = vmatpush1.bf16.msra.mxu0 %v232
    %256 = vmatprep.subr.bf16.mxu0 0
    %257 = vmatpush1.bf16.msra.mxu0 %v233
    %258 = vmatprep.subr.bf16.mxu0 0
    %259 = vmatpush1.bf16.msra.mxu0 0
    %260 = vmatprep.subr.bf16.mxu0 0
    %261 = vmatpush1.bf16.msra.mxu0 0
    %262 = vmatprep.subr.bf16.mxu0 0
    %263 = vmatpush1.bf16.msra.mxu0 0
    %264 = vmatprep.subr.bf16.mxu0 0
    %265 = vmatpush1.bf16.msra.mxu0 0
    %266 = vmatprep.subr.bf16.mxu0 0
    %267 = vmatpush1.bf16.msra.mxu0 0
    %268 = vmatprep.subr.bf16.mxu0 0
    %269 = vmatpush1.bf16.msra.mxu0 0
    %270 = vmatprep.subr.bf16.mxu0 0
    %271 = vmatpush1.bf16.msra.mxu0 0
    %272 = vmatprep.subr.bf16.mxu0 0
    %273 = vmatpush1.bf16.msra.mxu0 0
    %274 = vmatprep.mubr.bf16.mxu0 0
    %275 = vmatmul.mubr.bf16.gmra.mrb[0].mxu0 %v178
    %v276 = vpop.f32.mrb[0].mxu0
    %v277 = vadd.f32 0.0, %v276
    %v278 = vpop.f32.mrb[0].mxu0
    %v279 = vpop.f32.mrb[0].mxu0
    %v280 = vadd.f32 0.0, %v279
    %v281 = vpop.f32.mrb[0].mxu0
    %282 = vmatprep.mubr.bf16.mxu0 0
    %283 = vmatmul.mubr.bf16.gmra.mrb[0].mxu0 %v179
    %v284 = vpop.f32.mrb[0].mxu0
    %v285 = vadd.f32 0.0, %v284
    %v286 = vpop.f32.mrb[0].mxu0
    %v287 = vpop.f32.mrb[0].mxu0
    %v288 = vadd.f32 0.0, %v287
    %v289 = vpop.f32.mrb[0].mxu0
    %290 = vmatprep.mubr.bf16.mxu0 0
    %291 = vmatmul.mubr.bf16.gmra.mrb[0].mxu0 %v180
    %v292 = vpop.f32.mrb[0].mxu0
    %v293 = vadd.f32 0.0, %v292
    %v294 = vpop.f32.mrb[0].mxu0
    %v295 = vpop.f32.mrb[0].mxu0
    %v296 = vadd.f32 0.0, %v295
    %v297 = vpop.f32.mrb[0].mxu0
    %298 = vmatprep.mubr.bf16.mxu0 0
    %299 = vmatmul.mubr.bf16.gmra.mrb[0].mxu0 %v181
    %v300 = vpop.f32.mrb[0].mxu0
    %v301 = vadd.f32 0.0, %v300
    %v302 = vpop.f32.mrb[0].mxu0
    %v303 = vpop.f32.mrb[0].mxu0
    %v304 = vadd.f32 0.0, %v303
    %v305 = vpop.f32.mrb[0].mxu0
    %306 = vmatprep.mubr.bf16.mxu0 0
    %307 = vmatmul.mubr.bf16.gmra.mrb[0].mxu0 %v182
    %v308 = vpop.f32.mrb[0].mxu0
    %v309 = vadd.f32 0.0, %v308
    %v310 = vpop.f32.mrb[0].mxu0
    %v311 = vpop.f32.mrb[0].mxu0
    %v312 = vadd.f32 0.0, %v311
    %v313 = vpop.f32.mrb[0].mxu0
    %314 = vmatprep.mubr.bf16.mxu0 0
    %315 = vmatmul.mubr.bf16.gmra.mrb[0].mxu0 %v183
    %v316 = vpop.f32.mrb[0].mxu0
    %v317 = vadd.f32 0.0, %v316
    %v318 = vpop.f32.mrb[0].mxu0
    %v319 = vpop.f32.mrb[0].mxu0
    %v320 = vadd.f32 0.0, %v319
    %v321 = vpop.f32.mrb[0].mxu0
    %322 = vmatprep.mubr.bf16.mxu0 0
    %323 = vmatmul.mubr.bf16.gmra.mrb[0].mxu0 %v184
    %v324 = vpop.f32.mrb[0].mxu0
    %v325 = vadd.f32 0.0, %v324
    %v326 = vpop.f32.mrb[0].mxu0
    %v327 = vpop.f32.mrb[0].mxu0
    %v328 = vadd.f32 0.0, %v327
    %v329 = vpop.f32.mrb[0].mxu0
    %330 = vmatprep.mubr.bf16.mxu0 0
    %331 = vmatmul.mubr.bf16.gmra.mrb[0].mxu0 %v185
    %v332 = vpop.f32.mrb[0].mxu0
    %v333 = vadd.f32 0.0, %v332
    %v334 = vpop.f32.mrb[0].mxu0
    %v335 = vpop.f32.mrb[0].mxu0
    %v336 = vadd.f32 0.0, %v335
    %v337 = vpop.f32.mrb[0].mxu0
    %338 = vdwg.mxu0
    %v339 = vpack.c.bf16 %v280, %v277
    %v340 = vpack.c.bf16 %v288, %v285
    %v341 = vpack.c.bf16 %v296, %v293
    %v342 = vpack.c.bf16 %v304, %v301
    %v343 = vpack.c.bf16 %v312, %v309
    %v344 = vpack.c.bf16 %v320, %v317
    %v345 = vpack.c.bf16 %v328, %v325
    %v346 = vpack.c.bf16 %v336, %v333
    %v348 = vlaneseq
    %v349 = vshrl.u32 %v348, 7
    %v350 = vsub.s32 0, %v349
    %v351 = vrot.slane %v125, %v350
    %v369 = vunpack.c.l.b16 %v59
    %v370 = vunpack.c.l.b16 %v60
    %v371 = vunpack.c.l.b16 %v61
    %v372 = vunpack.c.l.b16 %v62
    %v373 = vunpack.c.l.b16 %v63
    %v374 = vunpack.c.l.b16 %v64
    %v375 = vunpack.c.l.b16 %v65
    %v376 = vunpack.c.l.b16 %v66
    %v377 = vunpack.c.l.b16 %v67
    %v378 = vunpack.c.l.b16 %v68
    %v379 = vunpack.c.l.b16 %v69
    %v380 = vunpack.c.l.b16 %v70
    %v381 = vunpack.c.l.b16 %v71
    %v382 = vunpack.c.l.b16 %v72
    %v383 = vunpack.c.l.b16 %v73
    %v384 = vunpack.c.l.b16 %v74
    %v385 = vpack.c.b16 %v370, %v369
    %v386 = vpack.c.b16 %v372, %v371
    %v387 = vpack.c.b16 %v374, %v373
    %v388 = vpack.c.b16 %v376, %v375
    %v389 = vpack.c.b16 %v378, %v377
    %v390 = vpack.c.b16 %v380, %v379
    %v391 = vpack.c.b16 %v382, %v381
    %v392 = vpack.c.b16 %v384, %v383
    %401 = vmatprep.subr.bf16.mxu0 0
    %402 = vmatpush1.bf16.msra.mxu0 %v339
    %403 = vmatprep.subr.bf16.mxu0 0
    %404 = vmatpush1.bf16.msra.mxu0 %v340
    %405 = vmatprep.subr.bf16.mxu0 0
    %406 = vmatpush1.bf16.msra.mxu0 %v341
    %407 = vmatprep.subr.bf16.mxu0 0
    %408 = vmatpush1.bf16.msra.mxu0 %v342
    %409 = vmatprep.subr.bf16.mxu0 0
    %410 = vmatpush1.bf16.msra.mxu0 %v343
    %411 = vmatprep.subr.bf16.mxu0 0
    %412 = vmatpush1.bf16.msra.mxu0 %v344
    %413 = vmatprep.subr.bf16.mxu0 0
    %414 = vmatpush1.bf16.msra.mxu0 %v345
    %415 = vmatprep.subr.bf16.mxu0 0
    %416 = vmatpush1.bf16.msra.mxu0 %v346
    %417 = vmatprep.subr.bf16.mxu0 0
    %418 = vmatpush1.bf16.msra.mxu0 0
    %419 = vmatprep.subr.bf16.mxu0 0
    %420 = vmatpush1.bf16.msra.mxu0 0
    %421 = vmatprep.subr.bf16.mxu0 0
    %422 = vmatpush1.bf16.msra.mxu0 0
    %423 = vmatprep.subr.bf16.mxu0 0
    %424 = vmatpush1.bf16.msra.mxu0 0
    %425 = vmatprep.subr.bf16.mxu0 0
    %426 = vmatpush1.bf16.msra.mxu0 0
    %427 = vmatprep.subr.bf16.mxu0 0
    %428 = vmatpush1.bf16.msra.mxu0 0
    %429 = vmatprep.subr.bf16.mxu0 0
    %430 = vmatpush1.bf16.msra.mxu0 0
    %431 = vmatprep.subr.bf16.mxu0 0
    %432 = vmatpush1.bf16.msra.mxu0 0
    %433 = vmatprep.mubr.bf16.mxu0 0
    %434 = vmatmul.mubr.bf16.gmra.mrb[0].mxu0 %v385
    %v435 = vpop.f32.mrb[0].mxu0
    %v436 = vadd.f32 %v351, %v435
    %v437 = vpop.f32.mrb[0].mxu0
    %v438 = vpop.f32.mrb[0].mxu0
    %v439 = vadd.f32 %v351, %v438
    %v440 = vpop.f32.mrb[0].mxu0
    %441 = vmatprep.mubr.bf16.mxu0 0
    %442 = vmatmul.mubr.bf16.gmra.mrb[0].mxu0 %v386
    %v443 = vpop.f32.mrb[0].mxu0
    %v444 = vadd.f32 %v351, %v443
    %v445 = vpop.f32.mrb[0].mxu0
    %v446 = vpop.f32.mrb[0].mxu0
    %v447 = vadd.f32 %v351, %v446
    %v448 = vpop.f32.mrb[0].mxu0
    %449 = vmatprep.mubr.bf16.mxu0 0
    %450 = vmatmul.mubr.bf16.gmra.mrb[0].mxu0 %v387
    %v451 = vpop.f32.mrb[0].mxu0
    %v452 = vadd.f32 %v351, %v451
    %v453 = vpop.f32.mrb[0].mxu0
    %v454 = vpop.f32.mrb[0].mxu0
    %v455 = vadd.f32 %v351, %v454
    %v456 = vpop.f32.mrb[0].mxu0
    %457 = vmatprep.mubr.bf16.mxu0 0
    %458 = vmatmul.mubr.bf16.gmra.mrb[0].mxu0 %v388
    %v459 = vpop.f32.mrb[0].mxu0
    %v460 = vadd.f32 %v351, %v459
    %v461 = vpop.f32.mrb[0].mxu0
    %v462 = vpop.f32.mrb[0].mxu0
    %v463 = vadd.f32 %v351, %v462
    %v464 = vpop.f32.mrb[0].mxu0
    %465 = vmatprep.mubr.bf16.mxu0 0
    %466 = vmatmul.mubr.bf16.gmra.mrb[0].mxu0 %v389
    %v467 = vpop.f32.mrb[0].mxu0
    %v468 = vadd.f32 %v351, %v467
    %v469 = vpop.f32.mrb[0].mxu0
    %v470 = vpop.f32.mrb[0].mxu0
    %v471 = vadd.f32 %v351, %v470
    %v472 = vpop.f32.mrb[0].mxu0
    %473 = vmatprep.mubr.bf16.mxu0 0
    %474 = vmatmul.mubr.bf16.gmra.mrb[0].mxu0 %v390
    %v475 = vpop.f32.mrb[0].mxu0
    %v476 = vadd.f32 %v351, %v475
    %v477 = vpop.f32.mrb[0].mxu0
    %v478 = vpop.f32.mrb[0].mxu0
    %v479 = vadd.f32 %v351, %v478
    %v480 = vpop.f32.mrb[0].mxu0
    %481 = vmatprep.mubr.bf16.mxu0 0
    %482 = vmatmul.mubr.bf16.gmra.mrb[0].mxu0 %v391
    %v483 = vpop.f32.mrb[0].mxu0
    %v484 = vadd.f32 %v351, %v483
    %v485 = vpop.f32.mrb[0].mxu0
    %v486 = vpop.f32.mrb[0].mxu0
    %v487 = vadd.f32 %v351, %v486
    %v488 = vpop.f32.mrb[0].mxu0
    %489 = vmatprep.mubr.bf16.mxu0 0
    %490 = vmatmul.mubr.bf16.gmra.mrb[0].mxu0 %v392
    %v491 = vpop.f32.mrb[0].mxu0
    %v492 = vadd.f32 %v351, %v491
    %v493 = vpop.f32.mrb[0].mxu0
    %v494 = vpop.f32.mrb[0].mxu0
    %v495 = vadd.f32 %v351, %v494
    %v496 = vpop.f32.mrb[0].mxu0
    %497 = vdwg.mxu0
    %v498 = vmax.f32 %v436, 0.0
    %v499 = vmax.f32 %v439, 0.0
    %v500 = vmax.f32 %v444, 0.0
    %v501 = vmax.f32 %v447, 0.0
    %v502 = vmax.f32 %v452, 0.0
    %v503 = vmax.f32 %v455, 0.0
    %v504 = vmax.f32 %v460, 0.0
    %v505 = vmax.f32 %v463, 0.0
    %v506 = vmax.f32 %v468, 0.0
    %v507 = vmax.f32 %v471, 0.0
    %v508 = vmax.f32 %v476, 0.0
    %v509 = vmax.f32 %v479, 0.0
    %v510 = vmax.f32 %v484, 0.0
    %v511 = vmax.f32 %v487, 0.0
    %v512 = vmax.f32 %v492, 0.0
    %v513 = vmax.f32 %v495, 0.0
    %v514 = vpack.c.bf16 %v499, %v498
    %v515 = vpack.c.bf16 %v501, %v500
    %v516 = vpack.c.bf16 %v503, %v502
    %v517 = vpack.c.bf16 %v505, %v504
    %v518 = vpack.c.bf16 %v507, %v506
    %v519 = vpack.c.bf16 %v509, %v508
    %v520 = vpack.c.bf16 %v511, %v510
    %v521 = vpack.c.bf16 %v513, %v512
    %v538 = vunpack.c.l.b16 %v92
    %v539 = vunpack.c.l.b16 %v93
    %v540 = vunpack.c.l.b16 %v94
    %v541 = vunpack.c.l.b16 %v95
    %v542 = vunpack.c.l.b16 %v96
    %v543 = vunpack.c.l.b16 %v97
    %v544 = vunpack.c.l.b16 %v98
    %v545 = vunpack.c.l.b16 %v99
    %v546 = vunpack.c.l.b16 %v100
    %v547 = vunpack.c.l.b16 %v101
    %v548 = vunpack.c.l.b16 %v102
    %v549 = vunpack.c.l.b16 %v103
    %v550 = vunpack.c.l.b16 %v104
    %v551 = vunpack.c.l.b16 %v105
    %v552 = vunpack.c.l.b16 %v106
    %v553 = vunpack.c.l.b16 %v107
    %v554 = vpack.c.b16 %v539, %v538
    %v555 = vpack.c.b16 %v541, %v540
    %v556 = vpack.c.b16 %v543, %v542
    %v557 = vpack.c.b16 %v545, %v544
    %v558 = vpack.c.b16 %v547, %v546
    %v559 = vpack.c.b16 %v549, %v548
    %v560 = vpack.c.b16 %v551, %v550
    %v561 = vpack.c.b16 %v553, %v552
    %570 = vmatprep.subr.bf16.mxu0 0
    %571 = vmatpush1.bf16.msra.mxu0 %v554
    %572 = vmatprep.subr.bf16.mxu0 0
    %573 = vmatpush1.bf16.msra.mxu0 %v555
    %574 = vmatprep.subr.bf16.mxu0 0
    %575 = vmatpush1.bf16.msra.mxu0 %v556
    %576 = vmatprep.subr.bf16.mxu0 0
    %577 = vmatpush1.bf16.msra.mxu0 %v557
    %578 = vmatprep.subr.bf16.mxu0 0
    %579 = vmatpush1.bf16.msra.mxu0 %v558
    %580 = vmatprep.subr.bf16.mxu0 0
    %581 = vmatpush1.bf16.msra.mxu0 %v559
    %582 = vmatprep.subr.bf16.mxu0 0
    %583 = vmatpush1.bf16.msra.mxu0 %v560
    %584 = vmatprep.subr.bf16.mxu0 0
    %585 = vmatpush1.bf16.msra.mxu0 %v561
    %586 = vmatprep.subr.bf16.mxu0 0
    %587 = vmatpush1.bf16.msra.mxu0 0
    %588 = vmatprep.subr.bf16.mxu0 0
    %589 = vmatpush1.bf16.msra.mxu0 0
    %590 = vmatprep.subr.bf16.mxu0 0
    %591 = vmatpush1.bf16.msra.mxu0 0
    %592 = vmatprep.subr.bf16.mxu0 0
    %593 = vmatpush1.bf16.msra.mxu0 0
    %594 = vmatprep.subr.bf16.mxu0 0
    %595 = vmatpush1.bf16.msra.mxu0 0
    %596 = vmatprep.subr.bf16.mxu0 0
    %597 = vmatpush1.bf16.msra.mxu0 0
    %598 = vmatprep.subr.bf16.mxu0 0
    %599 = vmatpush1.bf16.msra.mxu0 0
    %600 = vmatprep.subr.bf16.mxu0 0
    %601 = vmatpush1.bf16.msra.mxu0 0
    %602 = vmatprep.mubr.bf16.mxu0 0
    %603 = vmatmul.mubr.bf16.gmra.mrb[0].mxu0 %v514
    %v604 = vpop.f32.mrb[0].mxu0
    %v605 = vadd.f32 0.0, %v604
    %v606 = vpop.f32.mrb[0].mxu0
    %v607 = vpop.f32.mrb[0].mxu0
    %v608 = vadd.f32 0.0, %v607
    %v609 = vpop.f32.mrb[0].mxu0
    %610 = vmatprep.mubr.bf16.mxu0 0
    %611 = vmatmul.mubr.bf16.gmra.mrb[0].mxu0 %v515
    %v612 = vpop.f32.mrb[0].mxu0
    %v613 = vadd.f32 0.0, %v612
    %v614 = vpop.f32.mrb[0].mxu0
    %v615 = vpop.f32.mrb[0].mxu0
    %v616 = vadd.f32 0.0, %v615
    %v617 = vpop.f32.mrb[0].mxu0
    %618 = vmatprep.mubr.bf16.mxu0 0
    %619 = vmatmul.mubr.bf16.gmra.mrb[0].mxu0 %v516
    %v620 = vpop.f32.mrb[0].mxu0
    %v621 = vadd.f32 0.0, %v620
    %v622 = vpop.f32.mrb[0].mxu0
    %v623 = vpop.f32.mrb[0].mxu0
    %v624 = vadd.f32 0.0, %v623
    %v625 = vpop.f32.mrb[0].mxu0
    %626 = vmatprep.mubr.bf16.mxu0 0
    %627 = vmatmul.mubr.bf16.gmra.mrb[0].mxu0 %v517
    %v628 = vpop.f32.mrb[0].mxu0
    %v629 = vadd.f32 0.0, %v628
    %v630 = vpop.f32.mrb[0].mxu0
    %v631 = vpop.f32.mrb[0].mxu0
    %v632 = vadd.f32 0.0, %v631
    %v633 = vpop.f32.mrb[0].mxu0
    %634 = vmatprep.mubr.bf16.mxu0 0
    %635 = vmatmul.mubr.bf16.gmra.mrb[0].mxu0 %v518
    %v636 = vpop.f32.mrb[0].mxu0
    %v637 = vadd.f32 0.0, %v636
    %v638 = vpop.f32.mrb[0].mxu0
    %v639 = vpop.f32.mrb[0].mxu0
    %v640 = vadd.f32 0.0, %v639
    %v641 = vpop.f32.mrb[0].mxu0
    %642 = vmatprep.mubr.bf16.mxu0 0
    %643 = vmatmul.mubr.bf16.gmra.mrb[0].mxu0 %v519
    %v644 = vpop.f32.mrb[0].mxu0
    %v645 = vadd.f32 0.0, %v644
    %v646 = vpop.f32.mrb[0].mxu0
    %v647 = vpop.f32.mrb[0].mxu0
    %v648 = vadd.f32 0.0, %v647
    %v649 = vpop.f32.mrb[0].mxu0
    %650 = vmatprep.mubr.bf16.mxu0 0
    %651 = vmatmul.mubr.bf16.gmra.mrb[0].mxu0 %v520
    %v652 = vpop.f32.mrb[0].mxu0
    %v653 = vadd.f32 0.0, %v652
    %v654 = vpop.f32.mrb[0].mxu0
    %v655 = vpop.f32.mrb[0].mxu0
    %v656 = vadd.f32 0.0, %v655
    %v657 = vpop.f32.mrb[0].mxu0
    %658 = vmatprep.mubr.bf16.mxu0 0
    %659 = vmatmul.mubr.bf16.gmra.mrb[0].mxu0 %v521
    %v660 = vpop.f32.mrb[0].mxu0
    %v661 = vadd.f32 0.0, %v660
    %v662 = vpop.f32.mrb[0].mxu0
    %v663 = vpop.f32.mrb[0].mxu0
    %v664 = vadd.f32 0.0, %v663
    %v665 = vpop.f32.mrb[0].mxu0
    %666 = vdwg.mxu0
    %v667 = vpack.c.bf16 %v608, %v605
    %v668 = vpack.c.bf16 %v616, %v613
    %v669 = vpack.c.bf16 %v624, %v621
    %v670 = vpack.c.bf16 %v632, %v629
    %v671 = vpack.c.bf16 %v640, %v637
    %v672 = vpack.c.bf16 %v648, %v645
    %v673 = vpack.c.bf16 %v656, %v653
    %v674 = vpack.c.bf16 %v664, %v661
    %v676 = vlaneseq
    %v677 = vshrl.u32 %v676, 7
    %v678 = vsub.s32 0, %v677
    %v679 = vrot.slane %v127, %v678
    %681 = vmatprep.subr.bf16.mxu0 0
    %682 = vmatpush1.bf16.msra.mxu0 %v667
    %683 = vmatprep.subr.bf16.mxu0 0
    %684 = vmatpush1.bf16.msra.mxu0 %v668
    %685 = vmatprep.subr.bf16.mxu0 0
    %686 = vmatpush1.bf16.msra.mxu0 %v669
    %687 = vmatprep.subr.bf16.mxu0 0
    %688 = vmatpush1.bf16.msra.mxu0 %v670
    %689 = vmatprep.subr.bf16.mxu0 0
    %690 = vmatpush1.bf16.msra.mxu0 %v671
    %691 = vmatprep.subr.bf16.mxu0 0
    %692 = vmatpush1.bf16.msra.mxu0 %v672
    %693 = vmatprep.subr.bf16.mxu0 0
    %694 = vmatpush1.bf16.msra.mxu0 %v673
    %695 = vmatprep.subr.bf16.mxu0 0
    %696 = vmatpush1.bf16.msra.mxu0 %v674
    %697 = vmatprep.subr.bf16.mxu0 0
    %698 = vmatpush1.bf16.msra.mxu0 0
    %699 = vmatprep.subr.bf16.mxu0 0
    %700 = vmatpush1.bf16.msra.mxu0 0
    %701 = vmatprep.subr.bf16.mxu0 0
    %702 = vmatpush1.bf16.msra.mxu0 0
    %703 = vmatprep.subr.bf16.mxu0 0
    %704 = vmatpush1.bf16.msra.mxu0 0
    %705 = vmatprep.subr.bf16.mxu0 0
    %706 = vmatpush1.bf16.msra.mxu0 0
    %707 = vmatprep.subr.bf16.mxu0 0
    %708 = vmatpush1.bf16.msra.mxu0 0
    %709 = vmatprep.subr.bf16.mxu0 0
    %710 = vmatpush1.bf16.msra.mxu0 0
    %711 = vmatprep.subr.bf16.mxu0 0
    %712 = vmatpush1.bf16.msra.mxu0 0
    %713 = vmatprep.mubr.bf16.mxu0 0
    %714 = vmatmul.mubr.bf16.gmra.mrb[0].mxu0 %v385
    %v715 = vpop.f32.mrb[0].mxu0
    %v716 = vadd.f32 %v679, %v715
    %v717 = vpop.f32.mrb[0].mxu0
    %v718 = vpop.f32.mrb[0].mxu0
    %v719 = vadd.f32 %v679, %v718
    %v720 = vpop.f32.mrb[0].mxu0
    %721 = vmatprep.mubr.bf16.mxu0 0
    %722 = vmatmul.mubr.bf16.gmra.mrb[0].mxu0 %v386
    %v723 = vpop.f32.mrb[0].mxu0
    %v724 = vadd.f32 %v679, %v723
    %v725 = vpop.f32.mrb[0].mxu0
    %v726 = vpop.f32.mrb[0].mxu0
    %v727 = vadd.f32 %v679, %v726
    %v728 = vpop.f32.mrb[0].mxu0
    %729 = vmatprep.mubr.bf16.mxu0 0
    %730 = vmatmul.mubr.bf16.gmra.mrb[0].mxu0 %v387
    %v731 = vpop.f32.mrb[0].mxu0
    %v732 = vadd.f32 %v679, %v731
    %v733 = vpop.f32.mrb[0].mxu0
    %v734 = vpop.f32.mrb[0].mxu0
    %v735 = vadd.f32 %v679, %v734
    %v736 = vpop.f32.mrb[0].mxu0
    %737 = vmatprep.mubr.bf16.mxu0 0
    %738 = vmatmul.mubr.bf16.gmra.mrb[0].mxu0 %v388
    %v739 = vpop.f32.mrb[0].mxu0
    %v740 = vadd.f32 %v679, %v739
    %v741 = vpop.f32.mrb[0].mxu0
    %v742 = vpop.f32.mrb[0].mxu0
    %v743 = vadd.f32 %v679, %v742
    %v744 = vpop.f32.mrb[0].mxu0
    %745 = vmatprep.mubr.bf16.mxu0 0
    %746 = vmatmul.mubr.bf16.gmra.mrb[0].mxu0 %v389
    %v747 = vpop.f32.mrb[0].mxu0
    %v748 = vadd.f32 %v679, %v747
    %v749 = vpop.f32.mrb[0].mxu0
    %v750 = vpop.f32.mrb[0].mxu0
    %v751 = vadd.f32 %v679, %v750
    %v752 = vpop.f32.mrb[0].mxu0
    %753 = vmatprep.mubr.bf16.mxu0 0
    %754 = vmatmul.mubr.bf16.gmra.mrb[0].mxu0 %v390
    %v755 = vpop.f32.mrb[0].mxu0
    %v756 = vadd.f32 %v679, %v755
    %v757 = vpop.f32.mrb[0].mxu0
    %v758 = vpop.f32.mrb[0].mxu0
    %v759 = vadd.f32 %v679, %v758
    %v760 = vpop.f32.mrb[0].mxu0
    %761 = vmatprep.mubr.bf16.mxu0 0
    %762 = vmatmul.mubr.bf16.gmra.mrb[0].mxu0 %v391
    %v763 = vpop.f32.mrb[0].mxu0
    %v764 = vadd.f32 %v679, %v763
    %v765 = vpop.f32.mrb[0].mxu0
    %v766 = vpop.f32.mrb[0].mxu0
    %v767 = vadd.f32 %v679, %v766
    %v768 = vpop.f32.mrb[0].mxu0
    %769 = vmatprep.mubr.bf16.mxu0 0
    %770 = vmatmul.mubr.bf16.gmra.mrb[0].mxu0 %v392
    %v771 = vpop.f32.mrb[0].mxu0
    %v772 = vadd.f32 %v679, %v771
    %v773 = vpop.f32.mrb[0].mxu0
    %v774 = vpop.f32.mrb[0].mxu0
    %v775 = vadd.f32 %v679, %v774
    %v776 = vpop.f32.mrb[0].mxu0
    %777 = vdwg.mxu0
    %v778 = vmax.f32 %v716, 0.0
    %v779 = vmax.f32 %v719, 0.0
    %v780 = vmax.f32 %v724, 0.0
    %v781 = vmax.f32 %v727, 0.0
    %v782 = vmax.f32 %v732, 0.0
    %v783 = vmax.f32 %v735, 0.0
    %v784 = vmax.f32 %v740, 0.0
    %v785 = vmax.f32 %v743, 0.0
    %v786 = vmax.f32 %v748, 0.0
    %v787 = vmax.f32 %v751, 0.0
    %v788 = vmax.f32 %v756, 0.0
    %v789 = vmax.f32 %v759, 0.0
    %v790 = vmax.f32 %v764, 0.0
    %v791 = vmax.f32 %v767, 0.0
    %v792 = vmax.f32 %v772, 0.0
    %v793 = vmax.f32 %v775, 0.0
    %v794 = vpack.c.bf16 %v779, %v778
    %v795 = vpack.c.bf16 %v781, %v780
    %v796 = vpack.c.bf16 %v783, %v782
    %v797 = vpack.c.bf16 %v785, %v784
    %v798 = vpack.c.bf16 %v787, %v786
    %v799 = vpack.c.bf16 %v789, %v788
    %v800 = vpack.c.bf16 %v791, %v790
    %v801 = vpack.c.bf16 %v793, %v792
    %v803 = vlaneseq
    %v804 = vshrl.u32 %v803, 7
    %v805 = vsub.s32 0, %v804
    %v806 = vrot.slane %v129, %v805
    %v824 = vunpack.c.l.b16 %v109
    %v825 = vunpack.c.l.b16 %v110
    %v826 = vunpack.c.l.b16 %v111
    %v827 = vunpack.c.l.b16 %v112
    %v828 = vunpack.c.l.b16 %v113
    %v829 = vunpack.c.l.b16 %v114
    %v830 = vunpack.c.l.b16 %v115
    %v831 = vunpack.c.l.b16 %v116
    %v832 = vunpack.c.l.b16 %v117
    %v833 = vunpack.c.l.b16 %v118
    %v834 = vunpack.c.l.b16 %v119
    %v835 = vunpack.c.l.b16 %v120
    %v836 = vunpack.c.l.b16 %v121
    %v837 = vunpack.c.l.b16 %v122
    %v838 = vunpack.c.l.b16 %v123
    %v839 = vunpack.c.l.b16 %v124
    %v840 = vpack.c.b16 %v825, %v824
    %v841 = vpack.c.b16 %v827, %v826
    %v842 = vpack.c.b16 %v829, %v828
    %v843 = vpack.c.b16 %v831, %v830
    %v844 = vpack.c.b16 %v833, %v832
    %v845 = vpack.c.b16 %v835, %v834
    %v846 = vpack.c.b16 %v837, %v836
    %v847 = vpack.c.b16 %v839, %v838
    %856 = vmatprep.subr.bf16.mxu0 0
    %857 = vmatpush1.bf16.msra.mxu0 %v840
    %858 = vmatprep.subr.bf16.mxu0 0
    %859 = vmatpush1.bf16.msra.mxu0 %v841
    %860 = vmatprep.subr.bf16.mxu0 0
    %861 = vmatpush1.bf16.msra.mxu0 %v842
    %862 = vmatprep.subr.bf16.mxu0 0
    %863 = vmatpush1.bf16.msra.mxu0 %v843
    %864 = vmatprep.subr.bf16.mxu0 0
    %865 = vmatpush1.bf16.msra.mxu0 %v844
    %866 = vmatprep.subr.bf16.mxu0 0
    %867 = vmatpush1.bf16.msra.mxu0 %v845
    %868 = vmatprep.subr.bf16.mxu0 0
    %869 = vmatpush1.bf16.msra.mxu0 %v846
    %870 = vmatprep.subr.bf16.mxu0 0
    %871 = vmatpush1.bf16.msra.mxu0 %v847
    %872 = vmatprep.subr.bf16.mxu0 0
    %873 = vmatpush1.bf16.msra.mxu0 0
    %874 = vmatprep.subr.bf16.mxu0 0
    %875 = vmatpush1.bf16.msra.mxu0 0
    %876 = vmatprep.subr.bf16.mxu0 0
    %877 = vmatpush1.bf16.msra.mxu0 0
    %878 = vmatprep.subr.bf16.mxu0 0
    %879 = vmatpush1.bf16.msra.mxu0 0
    %880 = vmatprep.subr.bf16.mxu0 0
    %881 = vmatpush1.bf16.msra.mxu0 0
    %882 = vmatprep.subr.bf16.mxu0 0
    %883 = vmatpush1.bf16.msra.mxu0 0
    %884 = vmatprep.subr.bf16.mxu0 0
    %885 = vmatpush1.bf16.msra.mxu0 0
    %886 = vmatprep.subr.bf16.mxu0 0
    %887 = vmatpush1.bf16.msra.mxu0 0
    %888 = vmatprep.mubr.bf16.mxu0 0
    %889 = vmatmul.mubr.bf16.gmra.mrb[0].mxu0 %v794
    %v890 = vpop.f32.mrb[0].mxu0
    %v891 = vadd.f32 %v806, %v890
    %v892 = vpop.f32.mrb[0].mxu0
    %v893 = vpop.f32.mrb[0].mxu0
    %v894 = vadd.f32 %v806, %v893
    %v895 = vpop.f32.mrb[0].mxu0
    %896 = vmatprep.mubr.bf16.mxu0 0
    %897 = vmatmul.mubr.bf16.gmra.mrb[0].mxu0 %v795
    %v898 = vpop.f32.mrb[0].mxu0
    %v899 = vadd.f32 %v806, %v898
    %v900 = vpop.f32.mrb[0].mxu0
    %v901 = vpop.f32.mrb[0].mxu0
    %v902 = vadd.f32 %v806, %v901
    %v903 = vpop.f32.mrb[0].mxu0
    %904 = vmatprep.mubr.bf16.mxu0 0
    %905 = vmatmul.mubr.bf16.gmra.mrb[0].mxu0 %v796
    %v906 = vpop.f32.mrb[0].mxu0
    %v907 = vadd.f32 %v806, %v906
    %v908 = vpop.f32.mrb[0].mxu0
    %v909 = vpop.f32.mrb[0].mxu0
    %v910 = vadd.f32 %v806, %v909
    %v911 = vpop.f32.mrb[0].mxu0
    %912 = vmatprep.mubr.bf16.mxu0 0
    %913 = vmatmul.mubr.bf16.gmra.mrb[0].mxu0 %v797
    %v914 = vpop.f32.mrb[0].mxu0
    %v915 = vadd.f32 %v806, %v914
    %v916 = vpop.f32.mrb[0].mxu0
    %v917 = vpop.f32.mrb[0].mxu0
    %v918 = vadd.f32 %v806, %v917
    %v919 = vpop.f32.mrb[0].mxu0
    %920 = vmatprep.mubr.bf16.mxu0 0
    %921 = vmatmul.mubr.bf16.gmra.mrb[0].mxu0 %v798
    %v922 = vpop.f32.mrb[0].mxu0
    %v923 = vadd.f32 %v806, %v922
    %v924 = vpop.f32.mrb[0].mxu0
    %v925 = vpop.f32.mrb[0].mxu0
    %v926 = vadd.f32 %v806, %v925
    %v927 = vpop.f32.mrb[0].mxu0
    %928 = vmatprep.mubr.bf16.mxu0 0
    %929 = vmatmul.mubr.bf16.gmra.mrb[0].mxu0 %v799
    %v930 = vpop.f32.mrb[0].mxu0
    %v931 = vadd.f32 %v806, %v930
    %v932 = vpop.f32.mrb[0].mxu0
    %v933 = vpop.f32.mrb[0].mxu0
    %v934 = vadd.f32 %v806, %v933
    %v935 = vpop.f32.mrb[0].mxu0
    %936 = vmatprep.mubr.bf16.mxu0 0
    %937 = vmatmul.mubr.bf16.gmra.mrb[0].mxu0 %v800
    %v938 = vpop.f32.mrb[0].mxu0
    %v939 = vadd.f32 %v806, %v938
    %v940 = vpop.f32.mrb[0].mxu0
    %v941 = vpop.f32.mrb[0].mxu0
    %v942 = vadd.f32 %v806, %v941
    %v943 = vpop.f32.mrb[0].mxu0
    %944 = vmatprep.mubr.bf16.mxu0 0
    %945 = vmatmul.mubr.bf16.gmra.mrb[0].mxu0 %v801
    %v946 = vpop.f32.mrb[0].mxu0
    %v947 = vadd.f32 %v806, %v946
    %v948 = vpop.f32.mrb[0].mxu0
    %v949 = vpop.f32.mrb[0].mxu0
    %v950 = vadd.f32 %v806, %v949
    %v951 = vpop.f32.mrb[0].mxu0
    %952 = vdwg.mxu0
    %953 = vmax.xlane.f32.xlu0 %v891
    %v954 = vpop.xlane.xlu0 %953
    %955 = vmax.xlane.f32.xlu0 %v894
    %v956 = vpop.xlane.xlu0 %955
    %957 = vmax.xlane.f32.xlu0 %v899
    %v958 = vpop.xlane.xlu0 %957
    %959 = vmax.xlane.f32.xlu0 %v902
    %v960 = vpop.xlane.xlu0 %959
    %961 = vmax.xlane.f32.xlu0 %v907
    %v962 = vpop.xlane.xlu0 %961
    %963 = vmax.xlane.f32.xlu0 %v910
    %v964 = vpop.xlane.xlu0 %963
    %965 = vmax.xlane.f32.xlu0 %v915
    %v966 = vpop.xlane.xlu0 %965
    %967 = vmax.xlane.f32.xlu0 %v918
    %v968 = vpop.xlane.xlu0 %967
    %969 = vmax.xlane.f32.xlu0 %v923
    %v970 = vpop.xlane.xlu0 %969
    %971 = vmax.xlane.f32.xlu0 %v926
    %v972 = vpop.xlane.xlu0 %971
    %973 = vmax.xlane.f32.xlu0 %v931
    %v974 = vpop.xlane.xlu0 %973
    %975 = vmax.xlane.f32.xlu0 %v934
    %v976 = vpop.xlane.xlu0 %975
    %977 = vmax.xlane.f32.xlu0 %v939
    %v978 = vpop.xlane.xlu0 %977
    %979 = vmax.xlane.f32.xlu0 %v942
    %v980 = vpop.xlane.xlu0 %979
    %981 = vmax.xlane.f32.xlu0 %v947
    %v982 = vpop.xlane.xlu0 %981
    %983 = vmax.xlane.f32.xlu0 %v950
    %v984 = vpop.xlane.xlu0 %983
    %v985 = vsub.f32 %v891, %v954
    %v986 = vsub.f32 %v894, %v956
    %v987 = vsub.f32 %v899, %v958
    %v988 = vsub.f32 %v902, %v960
    %v989 = vsub.f32 %v907, %v962
    %v990 = vsub.f32 %v910, %v964
    %v991 = vsub.f32 %v915, %v966
    %v992 = vsub.f32 %v918, %v968
    %v993 = vsub.f32 %v923, %v970
    %v994 = vsub.f32 %v926, %v972
    %v995 = vsub.f32 %v931, %v974
    %v996 = vsub.f32 %v934, %v976
    %v997 = vsub.f32 %v939, %v978
    %v998 = vsub.f32 %v942, %v980
    %v999 = vsub.f32 %v947, %v982
    %v1000 = vsub.f32 %v950, %v984
    %v1001 = vmul.f32 %v985, 1.442695
    %v1002 = vpow.pop %v1001
    %v1003 = vmul.f32 %v986, 1.442695
    %v1004 = vpow.pop %v1003
    %v1005 = vmul.f32 %v987, 1.442695
    %v1006 = vpow.pop %v1005
    %v1007 = vmul.f32 %v988, 1.442695
    %v1008 = vpow.pop %v1007
    %v1009 = vmul.f32 %v989, 1.442695
    %v1010 = vpow.pop %v1009
    %v1011 = vmul.f32 %v990, 1.442695
    %v1012 = vpow.pop %v1011
    %v1013 = vmul.f32 %v991, 1.442695
    %v1014 = vpow.pop %v1013
    %v1015 = vmul.f32 %v992, 1.442695
    %v1016 = vpow.pop %v1015
    %v1017 = vmul.f32 %v993, 1.442695
    %v1018 = vpow.pop %v1017
    %v1019 = vmul.f32 %v994, 1.442695
    %v1020 = vpow.pop %v1019
    %v1021 = vmul.f32 %v995, 1.442695
    %v1022 = vpow.pop %v1021
    %v1023 = vmul.f32 %v996, 1.442695
    %v1024 = vpow.pop %v1023
    %v1025 = vmul.f32 %v997, 1.442695
    %v1026 = vpow.pop %v1025
    %v1027 = vmul.f32 %v998, 1.442695
    %v1028 = vpow.pop %v1027
    %v1029 = vmul.f32 %v999, 1.442695
    %v1030 = vpow.pop %v1029
    %v1031 = vmul.f32 %v1000, 1.442695
    %v1032 = vpow.pop %v1031
    %1033 = vadd.xlane.f32.xlu0 %v1002
    %v1034 = vpop.xlane.xlu0 %1033
    %1035 = vadd.xlane.f32.xlu0 %v1004
    %v1036 = vpop.xlane.xlu0 %1035
    %1037 = vadd.xlane.f32.xlu0 %v1006
    %v1038 = vpop.xlane.xlu0 %1037
    %1039 = vadd.xlane.f32.xlu0 %v1008
    %v1040 = vpop.xlane.xlu0 %1039
    %1041 = vadd.xlane.f32.xlu0 %v1010
    %v1042 = vpop.xlane.xlu0 %1041
    %1043 = vadd.xlane.f32.xlu0 %v1012
    %v1044 = vpop.xlane.xlu0 %1043
    %1045 = vadd.xlane.f32.xlu0 %v1014
    %v1046 = vpop.xlane.xlu0 %1045
    %1047 = vadd.xlane.f32.xlu0 %v1016
    %v1048 = vpop.xlane.xlu0 %1047
    %1049 = vadd.xlane.f32.xlu0 %v1018
    %v1050 = vpop.xlane.xlu0 %1049
    %1051 = vadd.xlane.f32.xlu0 %v1020
    %v1052 = vpop.xlane.xlu0 %1051
    %1053 = vadd.xlane.f32.xlu0 %v1022
    %v1054 = vpop.xlane.xlu0 %1053
    %1055 = vadd.xlane.f32.xlu0 %v1024
    %v1056 = vpop.xlane.xlu0 %1055
    %1057 = vadd.xlane.f32.xlu0 %v1026
    %v1058 = vpop.xlane.xlu0 %1057
    %1059 = vadd.xlane.f32.xlu0 %v1028
    %v1060 = vpop.xlane.xlu0 %1059
    %1061 = vadd.xlane.f32.xlu0 %v1030
    %v1062 = vpop.xlane.xlu0 %1061
    %1063 = vadd.xlane.f32.xlu0 %v1032
    %v1064 = vpop.xlane.xlu0 %1063
    %v1065 = vlog2.pop %v1034
    %v1066 = vmul.f32 %v1065, 0.6931472
    %v1067 = vlog2.pop %v1036
    %v1068 = vmul.f32 %v1067, 0.6931472
    %v1069 = vlog2.pop %v1038
    %v1070 = vmul.f32 %v1069, 0.6931472
    %v1071 = vlog2.pop %v1040
    %v1072 = vmul.f32 %v1071, 0.6931472
    %v1073 = vlog2.pop %v1042
    %v1074 = vmul.f32 %v1073, 0.6931472
    %v1075 = vlog2.pop %v1044
    %v1076 = vmul.f32 %v1075, 0.6931472
    %v1077 = vlog2.pop %v1046
    %v1078 = vmul.f32 %v1077, 0.6931472
    %v1079 = vlog2.pop %v1048
    %v1080 = vmul.f32 %v1079, 0.6931472
    %v1081 = vlog2.pop %v1050
    %v1082 = vmul.f32 %v1081, 0.6931472
    %v1083 = vlog2.pop %v1052
    %v1084 = vmul.f32 %v1083, 0.6931472
    %v1085 = vlog2.pop %v1054
    %v1086 = vmul.f32 %v1085, 0.6931472
    %v1087 = vlog2.pop %v1056
    %v1088 = vmul.f32 %v1087, 0.6931472
    %v1089 = vlog2.pop %v1058
    %v1090 = vmul.f32 %v1089, 0.6931472
    %v1091 = vlog2.pop %v1060
    %v1092 = vmul.f32 %v1091, 0.6931472
    %v1093 = vlog2.pop %v1062
    %v1094 = vmul.f32 %v1093, 0.6931472
    %v1095 = vlog2.pop %v1064
    %v1096 = vmul.f32 %v1095, 0.6931472
    %v1097 = vsub.f32 %v985, %v1066
    %v1098 = vsub.f32 %v986, %v1068
    %v1099 = vsub.f32 %v987, %v1070
    %v1100 = vsub.f32 %v988, %v1072
    %v1101 = vsub.f32 %v989, %v1074
    %v1102 = vsub.f32 %v990, %v1076
    %v1103 = vsub.f32 %v991, %v1078
    %v1104 = vsub.f32 %v992, %v1080
    %v1105 = vsub.f32 %v993, %v1082
    %v1106 = vsub.f32 %v994, %v1084
    %v1107 = vsub.f32 %v995, %v1086
    %v1108 = vsub.f32 %v996, %v1088
    %v1109 = vsub.f32 %v997, %v1090
    %v1110 = vsub.f32 %v998, %v1092
    %v1111 = vsub.f32 %v999, %v1094
    %v1112 = vsub.f32 %v1000, %v1096
    %1113 = vst [vmem:[%s4] sm:$0xff] %v1097
    %1114 = vst [vmem:[%s4 + $0x8] sm:$0xff] %v1098
    %1115 = vst [vmem:[%s4 + $0x10] sm:$0xff] %v1099
    %1116 = vst [vmem:[%s4 + $0x18] sm:$0xff] %v1100
    %1117 = vst [vmem:[%s4 + $0x20] sm:$0xff] %v1101
    %1118 = vst [vmem:[%s4 + $0x28] sm:$0xff] %v1102
    %1119 = vst [vmem:[%s4 + $0x30] sm:$0xff] %v1103
    %1120 = vst [vmem:[%s4 + $0x38] sm:$0xff] %v1104
    %1121 = vst [vmem:[%s4 + $0x40] sm:$0xff] %v1105
    %1122 = vst [vmem:[%s4 + $0x48] sm:$0xff] %v1106
    %1123 = vst [vmem:[%s4 + $0x50] sm:$0xff] %v1107
    %1124 = vst [vmem:[%s4 + $0x58] sm:$0xff] %v1108
    %1125 = vst [vmem:[%s4 + $0x60] sm:$0xff] %v1109
    %1126 = vst [vmem:[%s4 + $0x68] sm:$0xff] %v1110
    %1127 = vst [vmem:[%s4 + $0x70] sm:$0xff] %v1111
    %1128 = vst [vmem:[%s4 + $0x78] sm:$0xff] %v1112
    // Predicated region
    $region30: #{gcn_net_cora_forward.1} parent=1 // pred_check
      _
    $region31: #{gcn_net_cora_forward.1} parent=1 // pred_check_branch
      %1130 = sbr.rel (0) target = $region33
    $region32: #{gcn_net_cora_forward.1} parent=1 // pred_region
      _
    $region33: #{gcn_net_cora_forward.1} parent=1 // pred_fallthru
      _
    // Predicated region
    $region34: #{gcn_net_cora_forward.1} parent=1 // pred_check
      _
    $region35: #{gcn_net_cora_forward.1} parent=1 // pred_check_branch
      %1132 = sbr.rel (0) target = $region37
    $region36: #{gcn_net_cora_forward.1} parent=1 // pred_region
      _
    $region37: #{gcn_net_cora_forward.1} parent=1 // pred_fallthru
      _
    %1133 = vsyncpa [#allocation3], 1
    %1134 = vsyncpa [#allocation5], 1

</llo_original>
